<compile_context>
chip_gen: v7x
topology: tpu7x:2x2x1
jax: 0.10.0
libtpu: 0.0.40
codegen_flags: <defaults>
</compile_context>

<pallas_src>
import functools

import jax
import jax.numpy as jnp
from jax.experimental import pallas as pl
from jax.experimental.pallas import tpu as pltpu


# ---------------------------------------------------------------------------
# Long-sequence kernel: grid = (batch, length_tiles), halo-based tiling.
# ---------------------------------------------------------------------------
def _dsconv_long_kernel(x_ref, lh_ref, rh_ref, dw_ref, pw_ref, pb_ref, o_ref,
                        *, k, pad, tl, hw, length, ragged, cdt):
    # x_ref  : (1, Cin, TL)   current length tile (channels=sublanes, length=lanes)
    # lh_ref : (1, Cin, HW)   block just left of the tile  (halo source)
    # rh_ref : (1, Cin, HW)   block just right of the tile (halo source)
    # dw_ref : (Cin, k)       depthwise taps
    # pw_ref : (Cout, Cin)    pointwise (1x1) weights
    # pb_ref : (Cout, 1)      fused bias: pw @ dw_bias + pw_bias  (f32)
    # o_ref  : (1, Cout, TL)
    j = pl.program_id(1)
    xm = x_ref[0].astype(cdt)                    # (Cin, TL)
    lh = lh_ref[0].astype(cdt)                   # (Cin, HW)
    rh = rh_ref[0].astype(cdt)                   # (Cin, HW)
    dw = dw_ref[...].astype(cdt)                 # (Cin, k)

    # ---- boundary masking, once per tile, only on the small halo blocks ----
    iota_h = jax.lax.broadcasted_iota(jnp.int32, (1, hw), 1)
    # Left-halo column q feeds global input position j*TL - HW + q; positions
    # < 0 (the whole clamped halo of tile 0) must read as zero.
    lh = jnp.where(j * tl + iota_h >= hw, lh, 0).astype(cdt)
    # Right-halo column q is *needed* at global input position (j+1)*TL + q;
    # zero it when that position is >= length.  This covers both the clamped
    # last-tile halo and a ragged next tile shorter than the halo width.
    rh = jnp.where((j + 1) * tl + iota_h < length, rh, 0).astype(cdt)
    if ragged:
        # Garbage lanes past `length` in the partial last tile must not leak
        # into valid output columns through the d > 0 taps.
        iota_l = jax.lax.broadcasted_iota(jnp.int32, (1, tl), 1)
        xm = jnp.where(j * tl + iota_l < length, xm, 0).astype(cdt)

    # ---- depthwise conv: k shifted VPU multiply-accumulates (no per-tap mask)
    acc = xm * dw[:, pad:pad + 1]
    for t in range(k):
        d = t - pad
        if d == 0:
            continue
        if d < 0:
            shifted = jnp.concatenate([lh[:, hw + d:], xm[:, :tl + d]], axis=-1)
        else:
            shifted = jnp.concatenate([xm[:, d:], rh[:, :d]], axis=-1)
        acc = acc + shifted * dw[:, t:t + 1]

    # ---- pointwise 1x1 conv on the MXU, f32 accumulation, fused bias ----
    y = jnp.dot(pw_ref[...].astype(cdt), acc,
                preferred_element_type=jnp.float32) + pb_ref[...]
    o_ref[0] = y.astype(o_ref.dtype)


# ---------------------------------------------------------------------------
# Short-sequence kernel: whole sequence per block, Bt batch elements per step.
# ---------------------------------------------------------------------------
def _dsconv_short_kernel(x_ref, dw_ref, pw_ref, pb_ref, o_ref, *, k, pad, cdt):
    # x_ref : (Bt, Cin, L), o_ref : (Bt, Cout, L)
    bt, cin, length = x_ref.shape
    x = x_ref[...].astype(cdt)
    dw = dw_ref[...].astype(cdt)
    pw = pw_ref[...].astype(cdt)

    acc = x * dw[:, pad:pad + 1][None]
    for t in range(k):
        d = t - pad
        if d == 0 or abs(d) >= length:           # |d| >= L: tap fully padded
            continue
        if d < 0:
            shifted = jnp.concatenate(
                [jnp.zeros((bt, cin, -d), cdt), x[:, :, :length + d]], axis=-1)
        else:
            shifted = jnp.concatenate(
                [x[:, :, d:], jnp.zeros((bt, cin, d), cdt)], axis=-1)
        acc = acc + shifted * dw[:, t:t + 1][None]

    # Per-batch-row MXU matmul keeps the result directly in (Cout, L) layout
    # (no cross-axis transpose); Bt is a small static unroll.
    for b in range(bt):
        y = jnp.dot(pw, acc[b], preferred_element_type=jnp.float32) + pb_ref[...]
        o_ref[b] = y.astype(o_ref.dtype)


# ---------------------------------------------------------------------------
# Wrapper
# ---------------------------------------------------------------------------
def depthwise_separable_conv1d(x_ncl, dw_w, dw_b, pw_w, pw_b, *, tl_override=None):
    """x_ncl: (N, Cin, L).  dw_w: (Cin, 1, k), dw_b: (Cin,),
    pw_w: (Cout, Cin, 1), pw_b: (Cout,).  Returns (N, Cout, L)."""
    n, cin, length = x_ncl.shape
    cout = pw_w.shape[0]
    k = dw_w.shape[-1]
    assert k % 2 == 1, "only odd kernel sizes supported (see TODO above)"
    pad = k // 2

    # bf16 in -> bf16 depthwise/MXU path (v6e/v7x); f32 in -> f32 (v5e-safe).
    cdt = jnp.bfloat16 if x_ncl.dtype == jnp.bfloat16 else jnp.float32
    elt = 2 if cdt == jnp.bfloat16 else 4

    # Host-side weight reshapes + bias folding (tiny, one-time, f32).
    dw = dw_w[:, 0, :]                                   # (Cin, k)
    pw = pw_w[:, :, 0]                                   # (Cout, Cin)
    pb = (pw.astype(jnp.float32) @ dw_b.astype(jnp.float32)
          + pw_b.astype(jnp.float32)).reshape(cout, 1)   # fused bias (Cout, 1)

    # ---- length-tile selection, bounded by a working-set estimate so the
    # double-buffered blocks + (k-1) shifted temporaries + acc stay well under
    # v7x's 64 MiB/TC VMEM (v5e/v6e have 128 MiB, so this is conservative).
    bytes_per_lane = elt * ((2 + k) * cin + 2 * cout)
    tl = 2048
    while tl > 256 and tl * bytes_per_lane > (34 << 20):
        tl //= 2
    if tl_override is not None:
        assert tl_override % 128 == 0 and tl_override >= 256
        tl = tl_override

    vmem_limit = 48 * 1024 * 1024   # explicit: > v5e's 16 MiB default, < v7x's 64 MiB

    # ------------------------- short-sequence path -------------------------
    if length <= tl:
        # Pack several batch elements per grid step to amortize the ~0.35 us
        # fixed per-step overhead; keep at least 2 steps when N >= 2 so the
        # parallel grid still splits across v7x's two TensorCores.
        bt = max(1, (1 << 16) // max(cin * length, 1))
        bt = min(bt, n, 16, max(1, pl.cdiv(n, 2)))
        grid = (pl.cdiv(n, bt),)
        kernel = functools.partial(_dsconv_short_kernel, k=k, pad=pad, cdt=cdt)
        return pl.pallas_call(
            kernel,
            out_shape=jax.ShapeDtypeStruct((n, cout, length), x_ncl.dtype),
            grid_spec=pltpu.PrefetchScalarGridSpec(
                num_scalar_prefetch=0,
                grid=grid,
                in_specs=[
                    pl.BlockSpec((bt, cin, length), lambda i: (i, 0, 0)),
                    pl.BlockSpec((cin, k), lambda i: (0, 0)),
                    pl.BlockSpec((cout, cin), lambda i: (0, 0)),
                    pl.BlockSpec((cout, 1), lambda i: (0, 0)),
                ],
                out_specs=pl.BlockSpec((bt, cout, length), lambda i: (i, 0, 0)),
            ),
            compiler_params=pltpu.CompilerParams(
                dimension_semantics=("parallel",),
                vmem_limit_bytes=vmem_limit,
            ),
        )(x_ncl, dw, pw, pb)

    # -------------------------- long-sequence path --------------------------
    hw = 128                      # halo block = one lane-group
    assert pad < hw, "kernel size too large for the 128-lane halo blocks"
    r = tl // hw
    nt = pl.cdiv(length, tl)
    nh = pl.cdiv(length, hw)
    ragged = (length % tl) != 0

    kernel = functools.partial(_dsconv_long_kernel, k=k, pad=pad, tl=tl, hw=hw,
                               length=length, ragged=ragged, cdt=cdt)
    return pl.pallas_call(
        kernel,
        out_shape=jax.ShapeDtypeStruct((n, cout, length), x_ncl.dtype),
        grid_spec=pltpu.PrefetchScalarGridSpec(
            num_scalar_prefetch=0,
            grid=(n, nt),
            in_specs=[
                # Current length tile.
                pl.BlockSpec((1, cin, tl), lambda b, j: (b, 0, j)),
                # Left / right halo source blocks (clamped at the sequence
                # edges; edge columns are zero-masked once inside the kernel).
                pl.BlockSpec((1, cin, hw),
                             lambda b, j: (b, 0, jnp.maximum(j * r - 1, 0))),
                pl.BlockSpec((1, cin, hw),
                             lambda b, j: (b, 0, jnp.minimum((j + 1) * r, nh - 1))),
                # Grid-invariant weights (constant index -> DMA'd once; tiny).
                pl.BlockSpec((cin, k), lambda b, j: (0, 0)),
                pl.BlockSpec((cout, cin), lambda b, j: (0, 0)),
                pl.BlockSpec((cout, 1), lambda b, j: (0, 0)),
            ],
            out_specs=pl.BlockSpec((1, cout, tl), lambda b, j: (b, 0, j)),
        ),
        compiler_params=pltpu.CompilerParams(
            # Both axes independent: shards across v7x's 2 TensorCores.
            dimension_semantics=("parallel", "parallel"),
            vmem_limit_bytes=vmem_limit,
        ),
    )(x_ncl, x_ncl, x_ncl, dw, pw, pb)


# ---------------------------------------------------------------------------
# Pure-JAX reference (torch Conv1d semantics = cross-correlation) + test.
# ---------------------------------------------------------------------------
def _reference(x_ncl, dw_w, dw_b, pw_w, pw_b):
    cin = x_ncl.shape[1]
    k = dw_w.shape[-1]
    pad = k // 2
    dw_out = jax.lax.conv_general_dilated(
        x_ncl, dw_w, window_strides=(1,), padding=[(pad, pad)],
        dimension_numbers=("NCH", "OIH", "NCH"), feature_group_count=cin,
    ) + dw_b[None, :, None]
    pw_out = jax.lax.conv_general_dilated(
        dw_out, pw_w, window_strides=(1,), padding=[(0, 0)],
        dimension_numbers=("NCH", "OIH", "NCH"),
    ) + pw_b[None, :, None]
    return pw_out


def _make_params(key, n, cin, cout, length, k):
    k_x, k_dw, k_db, k_pw, k_pb = jax.random.split(key, 5)
    x = jax.random.normal(k_x, (n, cin, length), dtype=jnp.float32)
    dw_w = jax.random.normal(k_dw, (cin, 1, k), dtype=jnp.float32) * jnp.sqrt(2.0 / k)
    dw_b = 0.1 * jax.random.normal(k_db, (cin,), dtype=jnp.float32)
    pw_w = jax.random.normal(k_pw, (cout, cin, 1), dtype=jnp.float32) * jnp.sqrt(1.0 / cin)
    pw_b = 0.1 * jax.random.normal(k_pb, (cout,), dtype=jnp.float32)
    return x, dw_w, dw_b, pw_w, pw_b


if __name__ == "__main__":
    key = jax.random.PRNGKey(0)
    k_small, k_large = jax.random.split(key)

    # Small shapes consistent with the module's Conv1d usage: (batch, in_ch, L).
    # Exercises the batched short-sequence path.
    N, C_IN, C_OUT, L, K = 2, 4, 8, 16, 5
    x, dw_w, dw_b, pw_w, pw_b = _make_params(k_small, N, C_IN, C_OUT, L, K)
    out = depthwise_separable_conv1d(x, dw_w, dw_b, pw_w, pw_b)
    out = jax.block_until_ready(out)
    ref = _reference(x, dw_w, dw_b, pw_w, pw_b)
    assert out.shape == (N, C_OUT, L), out.shape
    assert jnp.allclose(out, ref, atol=1e-4, rtol=1e-4), \
        float(jnp.max(jnp.abs(out - ref)))

    # Second case: force a small tile (tl=256) so the length-tiled / halo /
    # ragged-last-tile path is exercised at small total size.
    N2, C_IN2, C_OUT2, L2 = 1, 8, 16, 600
    x2, dw_w2, dw_b2, pw_w2, pw_b2 = _make_params(k_large, N2, C_IN2, C_OUT2, L2, K)
    out2 = depthwise_separable_conv1d(x2, dw_w2, dw_b2, pw_w2, pw_b2,
                                      tl_override=256)
    out2 = jax.block_until_ready(out2)
    ref2 = _reference(x2, dw_w2, dw_b2, pw_w2, pw_b2)
    assert out2.shape == (N2, C_OUT2, L2), out2.shape
    assert jnp.allclose(out2, ref2, atol=1e-4, rtol=1e-4), \
        float(jnp.max(jnp.abs(out2 - ref2)))

    print("KERNEL_OK")
</pallas_src>

<mosaic_0001>
module attributes {stable_mosaic.version = 11 : i64} {
  func.func @_dsconv_short_kernel(%arg0: i32, %arg1: memref<1x4x16xf32, #tpu.memory_space<vmem>>, %arg2: memref<4x5xf32, #tpu.memory_space<vmem>>, %arg3: memref<8x4xf32, #tpu.memory_space<vmem>>, %arg4: memref<8x1xf32, #tpu.memory_space<vmem>>, %arg5: memref<1x8x16xf32, #tpu.memory_space<vmem>>) attributes {dimension_semantics = [#tpu.dimension_semantics<parallel>], iteration_bounds = array<i64: 2>, scalar_prefetch = 0 : i64, scratch_operands = 0 : i64, tpu.core_type = #tpu.core_type<tc>, window_params = [{transform_indices = @transform_0, window_bounds = array<i64: 1, 4, 16>}, {pipeline_mode = #tpu.pipeline_mode<synchronous>, transform_indices = @transform_1, window_bounds = array<i64: 4, 5>}, {pipeline_mode = #tpu.pipeline_mode<synchronous>, transform_indices = @transform_2, window_bounds = array<i64: 8, 4>}, {pipeline_mode = #tpu.pipeline_mode<synchronous>, transform_indices = @transform_3, window_bounds = array<i64: 8, 1>}, {transform_indices = @transform_4, window_bounds = array<i64: 1, 8, 16>}]} {
    %c0 = arith.constant 0 : index
    %c0_0 = arith.constant 0 : index
    %c0_1 = arith.constant 0 : index
    %0 = vector.load %arg1[%c0, %c0_0, %c0_1] : memref<1x4x16xf32, #tpu.memory_space<vmem>>, vector<1x4x16xf32>
    %c0_2 = arith.constant 0 : index
    %c0_3 = arith.constant 0 : index
    %1 = vector.load %arg2[%c0_2, %c0_3] : memref<4x5xf32, #tpu.memory_space<vmem>>, vector<4x5xf32>
    %c0_4 = arith.constant 0 : index
    %c0_5 = arith.constant 0 : index
    %2 = vector.load %arg3[%c0_4, %c0_5] : memref<8x4xf32, #tpu.memory_space<vmem>>, vector<8x4xf32>
    %3 = vector.extract_strided_slice %1 {offsets = [0, 2], sizes = [4, 1], strides = [1, 1]} : vector<4x5xf32> to vector<4x1xf32>
    %4 = vector.shape_cast %3 : vector<4x1xf32> to vector<1x4x1xf32>
    %5 = vector.broadcast %4 : vector<1x4x1xf32> to vector<1x4x16xf32>
    %6 = arith.mulf %0, %5 : vector<1x4x16xf32>
    %cst = arith.constant 0.000000e+00 : f32
    %7 = vector.broadcast %cst : f32 to vector<1x4x2xf32>
    %8 = vector.extract_strided_slice %0 {offsets = [0, 0, 0], sizes = [1, 4, 14], strides = [1, 1, 1]} : vector<1x4x16xf32> to vector<1x4x14xf32>
    %9 = tpu.concatenate %7, %8 in 2 : vector<1x4x2xf32>, vector<1x4x14xf32> -> vector<1x4x16xf32>
    %10 = vector.extract_strided_slice %1 {offsets = [0, 0], sizes = [4, 1], strides = [1, 1]} : vector<4x5xf32> to vector<4x1xf32>
    %11 = vector.shape_cast %10 : vector<4x1xf32> to vector<1x4x1xf32>
    %12 = vector.broadcast %11 : vector<1x4x1xf32> to vector<1x4x16xf32>
    %13 = arith.mulf %9, %12 : vector<1x4x16xf32>
    %14 = arith.addf %6, %13 : vector<1x4x16xf32>
    %cst_6 = arith.constant 0.000000e+00 : f32
    %15 = vector.broadcast %cst_6 : f32 to vector<1x4x1xf32>
    %16 = vector.extract_strided_slice %0 {offsets = [0, 0, 0], sizes = [1, 4, 15], strides = [1, 1, 1]} : vector<1x4x16xf32> to vector<1x4x15xf32>
    %17 = tpu.concatenate %15, %16 in 2 : vector<1x4x1xf32>, vector<1x4x15xf32> -> vector<1x4x16xf32>
    %18 = vector.extract_strided_slice %1 {offsets = [0, 1], sizes = [4, 1], strides = [1, 1]} : vector<4x5xf32> to vector<4x1xf32>
    %19 = vector.shape_cast %18 : vector<4x1xf32> to vector<1x4x1xf32>
    %20 = vector.broadcast %19 : vector<1x4x1xf32> to vector<1x4x16xf32>
    %21 = arith.mulf %17, %20 : vector<1x4x16xf32>
    %22 = arith.addf %14, %21 : vector<1x4x16xf32>
    %23 = vector.extract_strided_slice %0 {offsets = [0, 0, 1], sizes = [1, 4, 15], strides = [1, 1, 1]} : vector<1x4x16xf32> to vector<1x4x15xf32>
    %cst_7 = arith.constant 0.000000e+00 : f32
    %24 = vector.broadcast %cst_7 : f32 to vector<1x4x1xf32>
    %25 = tpu.concatenate %23, %24 in 2 : vector<1x4x15xf32>, vector<1x4x1xf32> -> vector<1x4x16xf32>
    %26 = vector.extract_strided_slice %1 {offsets = [0, 3], sizes = [4, 1], strides = [1, 1]} : vector<4x5xf32> to vector<4x1xf32>
    %27 = vector.shape_cast %26 : vector<4x1xf32> to vector<1x4x1xf32>
    %28 = vector.broadcast %27 : vector<1x4x1xf32> to vector<1x4x16xf32>
    %29 = arith.mulf %25, %28 : vector<1x4x16xf32>
    %30 = arith.addf %22, %29 : vector<1x4x16xf32>
    %31 = vector.extract_strided_slice %0 {offsets = [0, 0, 2], sizes = [1, 4, 14], strides = [1, 1, 1]} : vector<1x4x16xf32> to vector<1x4x14xf32>
    %cst_8 = arith.constant 0.000000e+00 : f32
    %32 = vector.broadcast %cst_8 : f32 to vector<1x4x2xf32>
    %33 = tpu.concatenate %31, %32 in 2 : vector<1x4x14xf32>, vector<1x4x2xf32> -> vector<1x4x16xf32>
    %34 = vector.extract_strided_slice %1 {offsets = [0, 4], sizes = [4, 1], strides = [1, 1]} : vector<4x5xf32> to vector<4x1xf32>
    %35 = vector.shape_cast %34 : vector<4x1xf32> to vector<1x4x1xf32>
    %36 = vector.broadcast %35 : vector<1x4x1xf32> to vector<1x4x16xf32>
    %37 = arith.mulf %33, %36 : vector<1x4x16xf32>
    %38 = arith.addf %30, %37 : vector<1x4x16xf32>
    %39 = vector.shape_cast %38 : vector<1x4x16xf32> to vector<4x16xf32>
    %cst_9 = arith.constant dense<0.000000e+00> : vector<8x16xf32>
    %40 = tpu.matmul %2, %39, %cst_9 {dimension_numbers = #tpu.dot_dimension_numbers<[1], [0], [0], [1], [0, 0, 1, 1], [], []>} : vector<8x4xf32>, vector<4x16xf32>, vector<8x16xf32> -> vector<8x16xf32>
    %c0_10 = arith.constant 0 : index
    %c0_11 = arith.constant 0 : index
    %41 = vector.load %arg4[%c0_10, %c0_11] : memref<8x1xf32, #tpu.memory_space<vmem>>, vector<8x1xf32>
    %42 = vector.broadcast %41 : vector<8x1xf32> to vector<8x16xf32>
    %43 = arith.addf %40, %42 : vector<8x16xf32>
    %c0_12 = arith.constant 0 : index
    %c0_13 = arith.constant 0 : index
    %c0_14 = arith.constant 0 : index
    %44 = vector.load %arg5[%c0_12, %c0_13, %c0_14] : memref<1x8x16xf32, #tpu.memory_space<vmem>>, vector<1x8x16xf32>
    %45 = vector.shape_cast %44 : vector<1x8x16xf32> to vector<8x16xf32>
    %46 = vector.shape_cast %43 : vector<8x16xf32> to vector<1x8x16xf32>
    tpu.vector_store %arg5[%c0_12, %c0_13, %c0_14], %46 {strides = array<i32>} : memref<1x8x16xf32, #tpu.memory_space<vmem>>, vector<1x8x16xf32>,
    return
  }
  func.func @transform_0(%arg0: i32) -> (i32, i32, i32) {
    %c0_i32 = arith.constant 0 : i32
    %c0_i32_0 = arith.constant 0 : i32
    %c0_i32_1 = arith.constant 0 : i32
    return %arg0, %c0_i32, %c0_i32_0 : i32, i32, i32
  }
  func.func @transform_1(%arg0: i32) -> (i32, i32) {
    %c0_i32 = arith.constant 0 : i32
    %c0_i32_0 = arith.constant 0 : i32
    %c0_i32_1 = arith.constant 0 : i32
    return %c0_i32, %c0_i32_0 : i32, i32
  }
  func.func @transform_2(%arg0: i32) -> (i32, i32) {
    %c0_i32 = arith.constant 0 : i32
    %c0_i32_0 = arith.constant 0 : i32
    %c0_i32_1 = arith.constant 0 : i32
    return %c0_i32, %c0_i32_0 : i32, i32
  }
  func.func @transform_3(%arg0: i32) -> (i32, i32) {
    %c0_i32 = arith.constant 0 : i32
    %c0_i32_0 = arith.constant 0 : i32
    %c0_i32_1 = arith.constant 0 : i32
    return %c0_i32, %c0_i32_0 : i32, i32
  }
  func.func @transform_4(%arg0: i32) -> (i32, i32, i32) {
    %c0_i32 = arith.constant 0 : i32
    %c0_i32_0 = arith.constant 0 : i32
    %c0_i32_1 = arith.constant 0 : i32
    return %arg0, %c0_i32, %c0_i32_0 : i32, i32, i32
  }
}

</mosaic_0001>

<llo_original>
// kernel: tpu_custom_call.1
$region0: #{tpu_custom_call.1}
  #allocation0 [shape = 'u32[]', space=smem, size = 0x4, offset = 0x4, fixed_abs, tag = 'smem constant byte address 0x4 - core index']
  #allocation1 [shape = 'u32[144,128]{1,0:T(1,128)}', space=vmem, size = 0x12000, scoped, tag = 'internal scratch']
  %s0 = inlined_call_operand.vmem [shape: f32[2,4,16], index: 0, kind: input, shape index: {}]
  %s1 = inlined_call_operand.vmem [shape: f32[4,5], index: 1, kind: input, shape index: {}]
  %s2 = inlined_call_operand.vmem [shape: f32[8,4], index: 2, kind: input, shape index: {}]
  %s3 = inlined_call_operand.vmem [shape: f32[8,1], index: 3, kind: input, shape index: {}]
  %s4 = inlined_call_operand.hbm [shape: f32[2,8,16], index: 4, kind: output, shape index: {}]
  %s5 = sld [smem:[#allocation0]]
  $region49: #{tpu_custom_call.1} parent=0
    _
  %s7 = ssub.s32 1, %s5
  %s8 = scalar_select 0, %s7, %s5
  $region1: #{tpu_custom_call.1} parent=0
    #allocation2 [shape = 'u8[8192]{0}', space=vmem, size = 0x2000, scoped, tag = 'output window, operand 0']
    #allocation3 [shape = 's32[2]{0}', space=sflag, size = 0x8, scoped, tag = 'scoped memory for tpu_custom_call.1']
    %9 = vsyncpa [#allocation3], 0
    %s10 = scalar_lea.sflag [#allocation3], 1
    %11 = vsyncpa %s10, 0
    loop: start=0, step=1, limit=4
    $region2: #{tpu_custom_call.1} parent=1 // loop_pre_header
      _
    $region3: #{tpu_custom_call.1} parent=1 // loop_header
      %s13 = sphi 0, %s17
      %p14 = scmp.ge.s32.totalorder %s13, 4
      %s23 = sphi 0, %s25
      %s26 = sphi 0, %s23
      %s27 = sphi 0, %s26
      %s43 = sphi 0, %s27
      %s47 = sphi 0, %s47
      %s49 = sphi 0, %s47
      %s50 = sphi 0, %s49
      %s64 = sphi 0, %s50
      %s68 = sphi 0, %s68
      %s70 = sphi 0, %s68
      %s71 = sphi 0, %s70
      %s85 = sphi 0, %s71
      %s89 = sphi 0, %s89
      %s91 = sphi 0, %s89
      %s92 = sphi 0, %s91
      %s106 = sphi 0, %s92
      %s112 = sphi 0, %s114
      %s115 = sphi 0, %s112
      %s116 = sphi 0, %s115
      %s132 = sphi 0, %s116
    $region4: #{tpu_custom_call.1} parent=1 // loop_header_branch
      %16 = sbr.rel (%p14) target = $region8
    $region5: #{tpu_custom_call.1} parent=1 // loop_body
      %s18 = ssub.s32 %s13, 1
      %s19 = ssub.s32 %s13, 2
      %s20 = sadd.s32 %s13, 1
      %s21 = ssub.s32 %s13, %s20
      %p22 = scmp.eq.s32.totalorder %s21, 0
      %s24 = sadd.s32 %s23, 1
      %s25 = scalar_select %p22, %s23, %s24
      %p28 = pneg %p22
      %p29 = scmp.eq.s32.totalorder %s13, 1
      %p30 = por %p28, %p29
      %p31 = scmp.ne.s32.totalorder %s23, %s26
      %p32 = scmp.eq.s32.totalorder %s13, 0
      %p33 = por %p31, %p32
      %p34 = scmp.ne.s32.totalorder %s23, %s26
      %p35 = scmp.eq.s32.totalorder %s18, 1
      %p36 = por %p34, %p35
      %p37 = scmp.ne.s32.totalorder %s26, %s27
      %p38 = scmp.eq.s32.totalorder %s18, 0
      %p39 = por %p37, %p38
      %p40 = scmp.ne.s32.totalorder %s26, %s27
      %p41 = scmp.eq.s32.totalorder %s19, 1
      %p42 = por %p40, %p41
      %p44 = scmp.ne.s32.totalorder %s27, %s43
      %p45 = scmp.eq.s32.totalorder %s19, 0
      %p46 = por %p44, %p45
      %s48 = sadd.s32 %s47, 1
      %p51 = scmp.eq.s32.totalorder %s13, 1
      %p52 = scmp.ne.s32.totalorder %s47, %s49
      %p53 = scmp.eq.s32.totalorder %s13, 0
      %p54 = por %p52, %p53
      %p55 = scmp.ne.s32.totalorder %s47, %s49
      %p56 = scmp.eq.s32.totalorder %s18, 1
      %p57 = por %p55, %p56
      %p58 = scmp.ne.s32.totalorder %s49, %s50
      %p59 = scmp.eq.s32.totalorder %s18, 0
      %p60 = por %p58, %p59
      %p61 = scmp.ne.s32.totalorder %s49, %s50
      %p62 = scmp.eq.s32.totalorder %s19, 1
      %p63 = por %p61, %p62
      %p65 = scmp.ne.s32.totalorder %s50, %s64
      %p66 = scmp.eq.s32.totalorder %s19, 0
      %p67 = por %p65, %p66
      %s69 = sadd.s32 %s68, 1
      %p72 = scmp.eq.s32.totalorder %s13, 1
      %p73 = scmp.ne.s32.totalorder %s68, %s70
      %p74 = scmp.eq.s32.totalorder %s13, 0
      %p75 = por %p73, %p74
      %p76 = scmp.ne.s32.totalorder %s68, %s70
      %p77 = scmp.eq.s32.totalorder %s18, 1
      %p78 = por %p76, %p77
      %p79 = scmp.ne.s32.totalorder %s70, %s71
      %p80 = scmp.eq.s32.totalorder %s18, 0
      %p81 = por %p79, %p80
      %p82 = scmp.ne.s32.totalorder %s70, %s71
      %p83 = scmp.eq.s32.totalorder %s19, 1
      %p84 = por %p82, %p83
      %p86 = scmp.ne.s32.totalorder %s71, %s85
      %p87 = scmp.eq.s32.totalorder %s19, 0
      %p88 = por %p86, %p87
      %s90 = sadd.s32 %s89, 1
      %p93 = scmp.eq.s32.totalorder %s13, 1
      %p94 = scmp.ne.s32.totalorder %s89, %s91
      %p95 = scmp.eq.s32.totalorder %s13, 0
      %p96 = por %p94, %p95
      %p97 = scmp.ne.s32.totalorder %s89, %s91
      %p98 = scmp.eq.s32.totalorder %s18, 1
      %p99 = por %p97, %p98
      %p100 = scmp.ne.s32.totalorder %s91, %s92
      %p101 = scmp.eq.s32.totalorder %s18, 0
      %p102 = por %p100, %p101
      %p103 = scmp.ne.s32.totalorder %s91, %s92
      %p104 = scmp.eq.s32.totalorder %s19, 1
      %p105 = por %p103, %p104
      %p107 = scmp.ne.s32.totalorder %s92, %s106
      %p108 = scmp.eq.s32.totalorder %s19, 0
      %p109 = por %p107, %p108
      %s110 = ssub.s32 %s13, %s20
      %p111 = scmp.eq.s32.totalorder %s110, 0
      %s113 = sadd.s32 %s112, 1
      %s114 = scalar_select %p111, %s112, %s113
      %p117 = pneg %p111
      %p118 = scmp.eq.s32.totalorder %s13, 1
      %p119 = por %p117, %p118
      %p120 = scmp.ne.s32.totalorder %s112, %s115
      %p121 = scmp.eq.s32.totalorder %s13, 0
      %p122 = por %p120, %p121
      %p123 = scmp.ne.s32.totalorder %s112, %s115
      %p124 = scmp.eq.s32.totalorder %s18, 1
      %p125 = por %p123, %p124
      %p126 = scmp.ne.s32.totalorder %s115, %s116
      %p127 = scmp.eq.s32.totalorder %s18, 0
      %p128 = por %p126, %p127
      %p129 = scmp.ne.s32.totalorder %s115, %s116
      %p130 = scmp.eq.s32.totalorder %s19, 1
      %p131 = por %p129, %p130
      %p133 = scmp.ne.s32.totalorder %s116, %s132
      %p134 = scmp.eq.s32.totalorder %s19, 0
      %p135 = por %p133, %p134
      %p136 = scmp.le.s32.totalorder 1, %s13
      %p137 = scmp.lt.s32.totalorder %s13, 3
      %p138 = pnand %p136, %p137
      %p139 = pneg %p138
      // Predicated region
      $region9: #{tpu_custom_call.1} parent=5 // pred_check
        _
      $region10: #{tpu_custom_call.1} parent=5 // pred_check_branch
        %141 = sbr.rel (%p138) target = $region12
      $region11: #{tpu_custom_call.1} parent=5 // pred_region
        %s142 = ssub.s32 %s13, 1
        // Predicated region
        $region13: #{tpu_custom_call.1} parent=11 // pred_check
          %p143 = pneg %p60
        $region14: #{tpu_custom_call.1} parent=11 // pred_check_branch
          %145 = sbr.rel (%p143) target = $region16
        $region15: #{tpu_custom_call.1} parent=11 // pred_region
          _
        $region16: #{tpu_custom_call.1} parent=11 // pred_fallthru
          _
        // Predicated region
        $region17: #{tpu_custom_call.1} parent=11 // pred_check
          %p146 = pneg %p81
        $region18: #{tpu_custom_call.1} parent=11 // pred_check_branch
          %148 = sbr.rel (%p146) target = $region20
        $region19: #{tpu_custom_call.1} parent=11 // pred_region
          _
        $region20: #{tpu_custom_call.1} parent=11 // pred_fallthru
          _
        // Predicated region
        $region21: #{tpu_custom_call.1} parent=11 // pred_check
          %p149 = pneg %p102
        $region22: #{tpu_custom_call.1} parent=11 // pred_check_branch
          %151 = sbr.rel (%p149) target = $region24
        $region23: #{tpu_custom_call.1} parent=11 // pred_region
          _
        $region24: #{tpu_custom_call.1} parent=11 // pred_fallthru
          _
      $region12: #{tpu_custom_call.1} parent=5 // pred_fallthru
        _
      %p152 = scmp.lt.s32.totalorder %s13, 2
      // Predicated region
      $region25: #{tpu_custom_call.1} parent=5 // pred_check
        %p153 = pneg %p152
      $region26: #{tpu_custom_call.1} parent=5 // pred_check_branch
        %155 = sbr.rel (%p153) target = $region28
      $region27: #{tpu_custom_call.1} parent=5 // pred_region
        // Predicated region
        $region29: #{tpu_custom_call.1} parent=27 // pred_check
          %p156 = pneg %p33
        $region30: #{tpu_custom_call.1} parent=27 // pred_check_branch
          %158 = sbr.rel (%p156) target = $region32
        $region31: #{tpu_custom_call.1} parent=27 // pred_region
          %p159 = scmp.lt.s32.totalorder %s13, 1
          %s160 = scalar_select %p159, %s13, 1
          %s161 = smul.addr %s160, 4
          %s162 = scalar_lea.vmem %s0, %s161
        $region32: #{tpu_custom_call.1} parent=27 // pred_fallthru
          _
      $region28: #{tpu_custom_call.1} parent=5 // pred_fallthru
        _
      %p163 = scmp.le.s32.totalorder 1, %s13
      %p164 = scmp.lt.s32.totalorder %s13, 3
      %p165 = pnand %p163, %p164
      %p166 = pneg %p165
      // Predicated region
      $region33: #{tpu_custom_call.1} parent=5 // pred_check
        _
      $region34: #{tpu_custom_call.1} parent=5 // pred_check_branch
        %168 = sbr.rel (%p165) target = $region36
      $region35: #{tpu_custom_call.1} parent=5 // pred_region
        %s169 = ssub.s32 %s13, 1
        %p170 = scmp.lt.s32.totalorder %s18, 1
        %s171 = scalar_select %p170, %s18, 1
        %s172 = smul.addr %s171, 4
        %s173 = scalar_lea.vmem %s0, %s172
        %p174 = pneg %p39
        %p175 = pneg %p36
        %p176 = pneg %p60
        %p177 = pneg %p57
        %p178 = pneg %p81
        %p179 = pneg %p78
        %p180 = pneg %p102
        %p181 = pneg %p99
        %p182 = pneg %p128
        %p183 = pneg %p125
        %s184 = sand.u32 %s115, 1
        %s185 = scalar_lea.sflag [#allocation3], %s184
        %s186 = sand.u32 %s115, 1
        %s187 = smul.addr %s186, 8
        %s188 = scalar_lea.vmem [#allocation2], %s187
        %p189 = scmp.lt.s32.totalorder %s18, 1
        %s190 = scalar_select %p189, %s18, 1
        %s191 = smul.addr %s190, 4
        %s192 = scalar_lea.vmem %s0, %s191
        %v193 = vld [vmem:[%s192] sm:$0xf]
        %v194 = vld [vmem:[%s1] sm:$0xf]
        %v195 = vld [vmem:[%s2] sm:$0xff]
        %197 = vset.pattern.permute.xlu0 2
        %198 = vperm.xlu0 %197, %v194
        %v199 = vpop.permute.xlu0 %198
        %v201 = vmul.f32 %v193, %v199
        %203 = vrot.lane.b32.xlu0 %v193, 2
        %v204 = vpop.permute.xlu0 %203
        %vm206 = vcmask 15360
        %v207 = vsel %vm206, 0.0, %v204
        %208 = vset.pattern.permute.xlu0 0
        %209 = vperm.xlu0 %208, %v194
        %v210 = vpop.permute.xlu0 %209
        %v212 = vmul.f32 %v207, %v210
        %v213 = vadd.f32 %v201, %v212
        %214 = vrot.lane.b32.xlu0 %v193, 1
        %v215 = vpop.permute.xlu0 %214
        %vm217 = vcmask 7168
        %v218 = vsel %vm217, 0.0, %v215
        %219 = vset.pattern.permute.xlu0 1
        %220 = vperm.xlu0 %219, %v194
        %v221 = vpop.permute.xlu0 %220
        %v223 = vmul.f32 %v218, %v221
        %v224 = vadd.f32 %v213, %v223
        %225 = vrot.lane.b32.xlu0 %v193, 127
        %v226 = vpop.permute.xlu0 %225
        %vm228 = vcmask 121856
        %v229 = vsel %vm228, %v226, 0.0
        %230 = vset.pattern.permute.xlu0 3
        %231 = vperm.xlu0 %230, %v194
        %v232 = vpop.permute.xlu0 %231
        %v234 = vmul.f32 %v229, %v232
        %v235 = vadd.f32 %v224, %v234
        %236 = vrot.lane.b32.xlu0 %v193, 126
        %v237 = vpop.permute.xlu0 %236
        %vm239 = vcmask 113664
        %v240 = vsel %vm239, %v237, 0.0
        %241 = vset.pattern.permute.xlu0 4
        %242 = vperm.xlu0 %241, %v194
        %v243 = vpop.permute.xlu0 %242
        %v245 = vmul.f32 %v240, %v243
        %v246 = vadd.f32 %v235, %v245
        %v247 = vld [vmem:[%s3] sm:$0xff]
        %249 = vset.pattern.permute.xlu0 0
        %250 = vperm.xlu0 %249, %v247
        %v251 = vpop.permute.xlu0 %250
        %vm253 = vcmask 31744
        %v255 = vsel %vm253, %v195, 0
        %vm257 = vcmask 1043456
        %v259 = vsel %vm257, %v246, 0
        %261 = vmatprep.subr.mxu0 0.0
        %262 = vmatpush1.msra.mxu0 %v259
        %263 = vmatprep.subr.mxu0 0.0
        %264 = vmatpush1.msra.mxu0 0.0
        %265 = vmatprep.subr.mxu0 0.0
        %266 = vmatpush1.msra.mxu0 0.0
        %267 = vmatprep.subr.mxu0 0.0
        %268 = vmatpush1.msra.mxu0 0.0
        %269 = vmatprep.subr.mxu0 0.0
        %270 = vmatpush1.msra.mxu0 0.0
        %271 = vmatprep.subr.mxu0 0.0
        %272 = vmatpush1.msra.mxu0 0.0
        %273 = vmatprep.subr.mxu0 0.0
        %274 = vmatpush1.msra.mxu0 0.0
        %275 = vmatprep.subr.mxu0 0.0
        %276 = vmatpush1.msra.mxu0 0.0
        %277 = vmatprep.subr.mxu0 0.0
        %278 = vmatpush1.msra.mxu0 0.0
        %279 = vmatprep.subr.mxu0 0.0
        %280 = vmatpush1.msra.mxu0 0.0
        %281 = vmatprep.subr.mxu0 0.0
        %282 = vmatpush1.msra.mxu0 0.0
        %283 = vmatprep.subr.mxu0 0.0
        %284 = vmatpush1.msra.mxu0 0.0
        %285 = vmatprep.subr.mxu0 0.0
        %286 = vmatpush1.msra.mxu0 0.0
        %287 = vmatprep.subr.mxu0 0.0
        %288 = vmatpush1.msra.mxu0 0.0
        %289 = vmatprep.subr.mxu0 0.0
        %290 = vmatpush1.msra.mxu0 0.0
        %291 = vmatprep.subr.mxu0 0.0
        %292 = vmatpush1.msra.mxu0 0.0
        %293 = vmatprep.subr.mxu0 0.0
        %294 = vmatpush1.msra.mxu0 0.0
        %295 = vmatprep.subr.mxu0 0.0
        %296 = vmatpush1.msra.mxu0 0.0
        %297 = vmatprep.subr.mxu0 0.0
        %298 = vmatpush1.msra.mxu0 0.0
        %299 = vmatprep.subr.mxu0 0.0
        %300 = vmatpush1.msra.mxu0 0.0
        %301 = vmatprep.subr.mxu0 0.0
        %302 = vmatpush1.msra.mxu0 0.0
        %303 = vmatprep.subr.mxu0 0.0
        %304 = vmatpush1.msra.mxu0 0.0
        %305 = vmatprep.subr.mxu0 0.0
        %306 = vmatpush1.msra.mxu0 0.0
        %307 = vmatprep.subr.mxu0 0.0
        %308 = vmatpush1.msra.mxu0 0.0
        %309 = vmatprep.subr.mxu0 0.0
        %310 = vmatpush1.msra.mxu0 0.0
        %311 = vmatprep.subr.mxu0 0.0
        %312 = vmatpush1.msra.mxu0 0.0
        %313 = vmatprep.subr.mxu0 0.0
        %314 = vmatpush1.msra.mxu0 0.0
        %315 = vmatprep.subr.mxu0 0.0
        %316 = vmatpush1.msra.mxu0 0.0
        %317 = vmatprep.subr.mxu0 0.0
        %318 = vmatpush1.msra.mxu0 0.0
        %319 = vmatprep.subr.mxu0 0.0
        %320 = vmatpush1.msra.mxu0 0.0
        %321 = vmatprep.subr.mxu0 0.0
        %322 = vmatpush1.msra.mxu0 0.0
        %323 = vmatprep.subr.mxu0 0.0
        %324 = vmatpush1.msra.mxu0 0.0
        %325 = vmatprep.mubr.f32.mxu0 0.0
        %326 = vmatmul.mubr.f32.gmra.mrb[0].mxu0 %v255
        %v327 = vpop.f32.mrb[0].mxu0
        %v328 = vadd.f32 %v251, %v327
        %v329 = vpop.f32.mrb[0].mxu0
        %330 = vdwg.mxu0
        %vm331 = vcmask 130048
        %332 = vst.msk [vmem:[%s188] sm:$0xff] %vm331, %v328
        %s333 = sand.u32 %s115, 1
        %s334 = scalar_lea.sflag [#allocation3], %s333
        %s335 = sand.u32 %s115, 1
        %s336 = smul.addr %s335, 8
        %s337 = scalar_lea.vmem [#allocation2], %s336
        // Predicated region
        $region37: #{tpu_custom_call.1} parent=35 // pred_check
          %p338 = pneg %p125
        $region38: #{tpu_custom_call.1} parent=35 // pred_check_branch
          %340 = sbr.rel (%p338) target = $region40
        $region39: #{tpu_custom_call.1} parent=35 // pred_region
          %s342 = ssub.s32 128, 128
          %343 = vsyncadd %s334, %s342
          %s344 = smul.addr %s18, 128
          %s345 = scalar_lea.hbm %s4, %s344
          %s347 = sshll.u32 %s337, 4
          %s348 = int_to_ptr.vmem [resolvable:$true] %s347
          %350 = dma.vmem_to_hbm [thread:$0]  %s348, 128, %s345, %s334
        $region40: #{tpu_custom_call.1} parent=35 // pred_fallthru
          _
      $region36: #{tpu_custom_call.1} parent=5 // pred_fallthru
        _
      %p351 = scmp.le.s32.totalorder 2, %s13
      // Predicated region
      $region41: #{tpu_custom_call.1} parent=5 // pred_check
        %p352 = pneg %p351
      $region42: #{tpu_custom_call.1} parent=5 // pred_check_branch
        %354 = sbr.rel (%p352) target = $region44
      $region43: #{tpu_custom_call.1} parent=5 // pred_region
        %s355 = ssub.s32 %s13, 2
        // Predicated region
        $region45: #{tpu_custom_call.1} parent=43 // pred_check
          %p356 = pneg %p131
        $region46: #{tpu_custom_call.1} parent=43 // pred_check_branch
          %358 = sbr.rel (%p356) target = $region48
        $region47: #{tpu_custom_call.1} parent=43 // pred_region
          %s359 = sand.u32 %s116, 1
          %s360 = scalar_lea.sflag [#allocation3], %s359
          %s361 = sand.u32 %s116, 1
          %s362 = smul.addr %s361, 8
          %s363 = scalar_lea.vmem [#allocation2], %s362
          %364 = dma.done %s360, 128
        $region48: #{tpu_custom_call.1} parent=43 // pred_fallthru
          _
      $region44: #{tpu_custom_call.1} parent=5 // pred_fallthru
        _
    $region6: #{tpu_custom_call.1} parent=1 // loop_footer
      %s17 = sadd.s32 1, %s13
    $region7: #{tpu_custom_call.1} parent=1 // loop_footer_branch
      %12 = sbr.rel target = $region3
    $region8: #{tpu_custom_call.1} parent=1 // loop_exit
      _
    %365 = vsyncpa [#allocation3], 1
    %s366 = scalar_lea.sflag [#allocation3], 1
    %367 = vsyncpa %s366, 1

</llo_original>
